<compile_context>
chip_gen: v7x
topology: tpu7x:2x2x1
jax: 0.10.0
libtpu: 0.0.40
codegen_flags: <defaults>
</compile_context>

<pallas_src>
import functools

import jax
import jax.numpy as jnp
from jax.experimental import pallas as pl
from jax.experimental.pallas import tpu as pltpu


def _round_up(n: int, m: int) -> int:
    return -(-n // m) * m


def _classifier_kernel(x_ref, wt_ref, o_ref, *, inv_temp: float):
    # x_ref: (TB, D), wt_ref: (D, C_pad), o_ref: (TB, C_pad)
    x = x_ref[...]
    # Row sum-of-squares in f32 (only the reduction path is widened).
    xf = x.astype(jnp.float32)
    sumsq = jnp.sum(xf * xf, axis=-1, keepdims=True)
    # F.normalize(x, dim=1, eps=1e-12) == x * rsqrt(max(sumsq, 1e-24)).
    # Fold 1/temp into the same per-row scale and apply it AFTER the matmul
    # (row scaling commutes with x @ W^T) -> no (TB, D) scaled intermediate.
    scale = jax.lax.rsqrt(jnp.maximum(sumsq, 1e-24)) * inv_temp
    logits = jnp.dot(x, wt_ref[...], preferred_element_type=jnp.float32)
    o_ref[...] = (logits * scale).astype(o_ref.dtype)


def prepare_classifier_weight(weight):
    """Transpose + zero-pad the (C, D) Linear weight to a lane-dense (D, C_pad).

    Hoist this to parameter-init time and pass the result via `prepared_weight`
    so the transpose/pad is not re-launched on every forward call.
    """
    C, D = weight.shape
    C_pad = _round_up(max(C, 1), 128)
    return jnp.zeros((D, C_pad), dtype=weight.dtype).at[:, :C].set(weight.T)


def res_classifier_mme_forward(x, weight, temp=0.05, return_feat=False,
                               block_rows=512, prepared_weight=None):
    """ResClassifier_MME.forward.  x: (B, D); weight: (C, D) (PyTorch Linear layout)."""
    if return_feat:
        # Original module returns the raw (un-normalized) feature.
        return x

    B, D = x.shape
    C, D_w = weight.shape
    assert D == D_w, "feature dims must match"

    wt = prepared_weight if prepared_weight is not None else prepare_classifier_weight(weight)
    C_pad = wt.shape[1]
    out_dtype = x.dtype

    # --- batch tile selection -------------------------------------------------
    # Multiple of 8 sublanes; at least 2 grid steps when B > 8 so a second
    # TensorCore (v7x megacore) gets work.
    B8 = _round_up(max(B, 1), 8)
    TB = min(block_rows, B8)
    if B > 8:
        TB = min(TB, _round_up(pl.cdiv(B, 2), 8))

    def footprint(tb):
        # double-buffered x + out streams, resident (default double-buffered) weight
        return (2 * tb * D * x.dtype.itemsize
                + 2 * D * C_pad * wt.dtype.itemsize
                + 2 * tb * C_pad * x.dtype.itemsize)

    # Keep the working set comfortably under v5e's 16 MiB scoped default and
    # v7x's 64 MiB physical VMEM.
    while TB > 8 and footprint(TB) > (40 << 20):
        TB = _round_up(TB // 2, 8)
    # TODO(synk): for very large D (>= 8K), tile D as an "arbitrary" K grid axis
    # with an f32 accumulator scratch instead of shrinking TB.

    grid = pl.cdiv(B, TB)
    vmem_limit = max(int(1.5 * footprint(TB)), 16 << 20)

    kernel = functools.partial(_classifier_kernel, inv_temp=float(1.0 / temp))

    out = pl.pallas_call(
        kernel,
        out_shape=jax.ShapeDtypeStruct((B, C_pad), out_dtype),
        grid_spec=pltpu.PrefetchScalarGridSpec(
            num_scalar_prefetch=0,
            grid=(grid,),
            in_specs=[
                # x streamed per batch tile; ragged last block masked by Pallas.
                pl.BlockSpec((TB, D), lambda i: (i, 0)),
                # Weight resident (constant index_map -> DMA'd once).
                pl.BlockSpec((D, C_pad), lambda i: (0, 0)),
            ],
            out_specs=pl.BlockSpec((TB, C_pad), lambda i: (i, 0)),
        ),
        compiler_params=pltpu.CompilerParams(
            dimension_semantics=("parallel",),
            vmem_limit_bytes=vmem_limit,
        ),
    )(x, wt)

    # Drop only the lane-padding columns (no row padding was added).
    return out[:, :C]


if __name__ == "__main__":
    # Small shapes consistent with the module (input_size=2048, num_classes=10
    # in the original; feature dim scaled down here).
    B, D, C = 8, 256, 10
    temp = 0.05

    key = jax.random.PRNGKey(0)
    kx, kw, kx2 = jax.random.split(key, 3)
    x = jax.random.normal(kx, (B, D), dtype=jnp.float32)
    # weights_init: normal(0.0, 0.1), shape (num_classes, input_size)
    weight = 0.1 * jax.random.normal(kw, (C, D), dtype=jnp.float32)

    # Hoist the weight transpose/pad out of the per-call path (done once here).
    wt_prepared = prepare_classifier_weight(weight)

    out = res_classifier_mme_forward(x, weight, temp=temp, prepared_weight=wt_prepared)
    out = jax.block_until_ready(out)

    # Reference: F.normalize (eps=1e-12) + bias-free Linear / temp, in plain JAX.
    xn_ref = x / jnp.maximum(jnp.sqrt(jnp.sum(x * x, axis=-1, keepdims=True)), 1e-12)
    ref = (xn_ref @ weight.T) / temp
    assert out.shape == (B, C)
    assert out.dtype == x.dtype
    assert jnp.allclose(out, ref, atol=1e-4, rtol=1e-4)

    # Ragged batch (B not a multiple of 8) exercises the Pallas boundary masking
    # that replaced the host-side jnp.pad.
    B2 = 5
    x2 = jax.random.normal(kx2, (B2, D), dtype=jnp.float32)
    out2 = jax.block_until_ready(
        res_classifier_mme_forward(x2, weight, temp=temp, prepared_weight=wt_prepared))
    xn2 = x2 / jnp.maximum(jnp.sqrt(jnp.sum(x2 * x2, axis=-1, keepdims=True)), 1e-12)
    ref2 = (xn2 @ weight.T) / temp
    assert out2.shape == (B2, C)
    assert jnp.allclose(out2, ref2, atol=1e-4, rtol=1e-4)

    # return_feat path (passthrough, matches original module semantics).
    feat = res_classifier_mme_forward(x, weight, temp=temp, return_feat=True)
    assert feat.shape == (B, D)

    print("KERNEL_OK")
</pallas_src>

<mosaic_0001>
module attributes {stable_mosaic.version = 11 : i64} {
  func.func @_classifier_kernel(%arg0: i32, %arg1: memref<8x256xf32, #tpu.memory_space<vmem>>, %arg2: memref<256x128xf32, #tpu.memory_space<vmem>>, %arg3: memref<8x128xf32, #tpu.memory_space<vmem>>) attributes {dimension_semantics = [#tpu.dimension_semantics<parallel>], iteration_bounds = array<i64: 1>, scalar_prefetch = 0 : i64, scratch_operands = 0 : i64, tpu.core_type = #tpu.core_type<tc>, window_params = [{transform_indices = @transform_0, window_bounds = array<i64: 8, 256>}, {pipeline_mode = #tpu.pipeline_mode<synchronous>, transform_indices = @transform_1, window_bounds = array<i64: 256, 128>}, {transform_indices = @transform_2, window_bounds = array<i64: 8, 128>}]} {
    %c0 = arith.constant 0 : index
    %c0_0 = arith.constant 0 : index
    %0 = vector.load %arg1[%c0, %c0_0] : memref<8x256xf32, #tpu.memory_space<vmem>>, vector<8x256xf32>
    %1 = arith.mulf %0, %0 : vector<8x256xf32>
    %cst = arith.constant dense<0.000000e+00> : vector<8xf32>
    %2 = vector.multi_reduction <add>, %1, %cst [1] : vector<8x256xf32> to vector<8xf32>
    %3 = vector.shape_cast %2 : vector<8xf32> to vector<8x1xf32>
    %cst_1 = arith.constant 1.000000e-24 : f32
    %4 = vector.broadcast %cst_1 : f32 to vector<8x1xf32>
    %5 = arith.maximumf %3, %4 : vector<8x1xf32>
    %6 = math.rsqrt %5 : vector<8x1xf32>
    %cst_2 = arith.constant 2.000000e+01 : f32
    %7 = vector.broadcast %cst_2 : f32 to vector<8x1xf32>
    %8 = arith.mulf %6, %7 : vector<8x1xf32>
    %c0_3 = arith.constant 0 : index
    %c0_4 = arith.constant 0 : index
    %9 = vector.load %arg2[%c0_3, %c0_4] : memref<256x128xf32, #tpu.memory_space<vmem>>, vector<256x128xf32>
    %cst_5 = arith.constant dense<0.000000e+00> : vector<8x128xf32>
    %10 = tpu.matmul %0, %9, %cst_5 {dimension_numbers = #tpu.dot_dimension_numbers<[1], [0], [0], [1], [0, 0, 1, 1], [], []>} : vector<8x256xf32>, vector<256x128xf32>, vector<8x128xf32> -> vector<8x128xf32>
    %11 = vector.broadcast %8 : vector<8x1xf32> to vector<8x128xf32>
    %12 = arith.mulf %10, %11 : vector<8x128xf32>
    %c0_6 = arith.constant 0 : index
    %c0_7 = arith.constant 0 : index
    %13 = vector.load %arg3[%c0_6, %c0_7] : memref<8x128xf32, #tpu.memory_space<vmem>>, vector<8x128xf32>
    tpu.vector_store %arg3[%c0_6, %c0_7], %12 {strides = array<i32>} : memref<8x128xf32, #tpu.memory_space<vmem>>, vector<8x128xf32>,
    return
  }
  func.func @transform_0(%arg0: i32) -> (i32, i32) {
    %c0_i32 = arith.constant 0 : i32
    %c0_i32_0 = arith.constant 0 : i32
    return %arg0, %c0_i32 : i32, i32
  }
  func.func @transform_1(%arg0: i32) -> (i32, i32) {
    %c0_i32 = arith.constant 0 : i32
    %c0_i32_0 = arith.constant 0 : i32
    %c0_i32_1 = arith.constant 0 : i32
    return %c0_i32, %c0_i32_0 : i32, i32
  }
  func.func @transform_2(%arg0: i32) -> (i32, i32) {
    %c0_i32 = arith.constant 0 : i32
    %c0_i32_0 = arith.constant 0 : i32
    return %arg0, %c0_i32 : i32, i32
  }
}

</mosaic_0001>

<llo_original>
// kernel: tpu_custom_call.1
$region0: #{tpu_custom_call.1}
  #allocation0 [shape = 'u32[]', space=smem, size = 0x4, offset = 0x4, fixed_abs, tag = 'smem constant byte address 0x4 - core index']
  #allocation1 [shape = 'u32[144,128]{1,0:T(1,128)}', space=vmem, size = 0x12000, scoped, tag = 'internal scratch']
  %s0 = inlined_call_operand.hbm [shape: f32[8,256], index: 0, kind: input, shape index: {}]
  %s1 = inlined_call_operand.hbm [shape: f32[256,128], index: 1, kind: input, shape index: {}]
  %s2 = inlined_call_operand.hbm [shape: f32[8,128], index: 2, kind: output, shape index: {}]
  %s3 = sld [smem:[#allocation0]]
  $region26: #{tpu_custom_call.1} parent=0
    _
  %s5 = ssub.s32 1, %s3
  %s6 = scalar_select 0, %s5, %s3
  $region1: #{tpu_custom_call.1} parent=0
    #allocation2 [shape = 'u8[8192]{0}', space=vmem, size = 0x2000, scoped, tag = 'input window, operand 0, single buffered']
    #allocation3 [shape = 's32[1]{0}', space=sflag, size = 0x4, scoped, tag = 'scoped memory for tpu_custom_call.1']
    #allocation4 [shape = 's32[1]{0}', space=sflag, size = 0x4, scoped, tag = 'scoped memory for tpu_custom_call.1']
    #allocation5 [shape = 'u8[131072]{0}', space=vmem, size = 0x20000, scoped, tag = 'input window, operand 1, single buffered']
    #allocation6 [shape = 's32[1]{0}', space=sflag, size = 0x4, scoped, tag = 'scoped memory for tpu_custom_call.1']
    #allocation7 [shape = 'u8[4096]{0}', space=vmem, size = 0x1000, scoped, tag = 'output window, operand 0, single buffered']
    %7 = vsyncpa [#allocation3], 0
    %8 = vsyncpa [#allocation6], 0
    %9 = vsyncpa [#allocation4], 0
    // Predicated region
    $region2: #{tpu_custom_call.1} parent=1 // pred_check
      _
    $region3: #{tpu_custom_call.1} parent=1 // pred_check_branch
      %11 = sbr.rel (0) target = $region5
    $region4: #{tpu_custom_call.1} parent=1 // pred_region
      %s13 = ssub.s32 256, 256
      %14 = vsyncadd [#allocation3], %s13
      %s16 = sshll.u32 [#allocation2], 4
      %s17 = int_to_ptr.vmem [resolvable:$true] %s16
      %19 = dma.hbm_to_vmem [thread:$0]  %s0, 256, %s17, [#allocation3]
    $region5: #{tpu_custom_call.1} parent=1 // pred_fallthru
      _
    // Predicated region
    $region6: #{tpu_custom_call.1} parent=1 // pred_check
      _
    $region7: #{tpu_custom_call.1} parent=1 // pred_check_branch
      %21 = sbr.rel (0) target = $region9
    $region8: #{tpu_custom_call.1} parent=1 // pred_region
      %s23 = ssub.s32 4096, 4096
      %24 = vsyncadd [#allocation6], %s23
      %s25 = sshll.u32 [#allocation5], 4
      %s26 = int_to_ptr.vmem [resolvable:$true] %s25
      %31 = dma.hbm_to_vmem [thread:$0]  %s1, 4096, %s26, [#allocation6], 128, 128, 8
    $region9: #{tpu_custom_call.1} parent=1 // pred_fallthru
      _
    // Predicated region
    $region10: #{tpu_custom_call.1} parent=1 // pred_check
      _
    $region11: #{tpu_custom_call.1} parent=1 // pred_check_branch
      %33 = sbr.rel (0) target = $region13
    $region12: #{tpu_custom_call.1} parent=1 // pred_region
      %34 = dma.done [#allocation3], 256
    $region13: #{tpu_custom_call.1} parent=1 // pred_fallthru
      _
    // Predicated region
    $region14: #{tpu_custom_call.1} parent=1 // pred_check
      _
    $region15: #{tpu_custom_call.1} parent=1 // pred_check_branch
      %36 = sbr.rel (0) target = $region17
    $region16: #{tpu_custom_call.1} parent=1 // pred_region
      %37 = dma.done [#allocation6], 4096
    $region17: #{tpu_custom_call.1} parent=1 // pred_fallthru
      _
    %v38 = vld [vmem:[#allocation2] sm:$0xff]
    %v39 = vld [vmem:[#allocation2 + $0x8] sm:$0xff]
    %v40 = vmul.f32 %v38, %v38
    %v41 = vmul.f32 %v39, %v39
    %v42 = vadd.f32 %v40, %v41
    %43 = vadd.xlane.f32.xlu0 %v42
    %v44 = vpop.xlane.xlu0 %43
    %v45 = vmax.f32 %v44, 1e-24
    %v46 = vrsqrt.pop %v45
    %v47 = vmul.f32 %v46, 20.0
    %v48 = vld [vmem:[#allocation5] sm:$0xff]
    %v49 = vld [vmem:[#allocation5 + $0x8] sm:$0xff]
    %v50 = vld [vmem:[#allocation5 + $0x10] sm:$0xff]
    %v51 = vld [vmem:[#allocation5 + $0x18] sm:$0xff]
    %v52 = vld [vmem:[#allocation5 + $0x20] sm:$0xff]
    %v53 = vld [vmem:[#allocation5 + $0x28] sm:$0xff]
    %v54 = vld [vmem:[#allocation5 + $0x30] sm:$0xff]
    %v55 = vld [vmem:[#allocation5 + $0x38] sm:$0xff]
    %v56 = vld [vmem:[#allocation5 + $0x40] sm:$0xff]
    %v57 = vld [vmem:[#allocation5 + $0x48] sm:$0xff]
    %v58 = vld [vmem:[#allocation5 + $0x50] sm:$0xff]
    %v59 = vld [vmem:[#allocation5 + $0x58] sm:$0xff]
    %v60 = vld [vmem:[#allocation5 + $0x60] sm:$0xff]
    %v61 = vld [vmem:[#allocation5 + $0x68] sm:$0xff]
    %v62 = vld [vmem:[#allocation5 + $0x70] sm:$0xff]
    %v63 = vld [vmem:[#allocation5 + $0x78] sm:$0xff]
    %v64 = vld [vmem:[#allocation5 + $0x80] sm:$0xff]
    %v65 = vld [vmem:[#allocation5 + $0x88] sm:$0xff]
    %v66 = vld [vmem:[#allocation5 + $0x90] sm:$0xff]
    %v67 = vld [vmem:[#allocation5 + $0x98] sm:$0xff]
    %v68 = vld [vmem:[#allocation5 + $0xa0] sm:$0xff]
    %v69 = vld [vmem:[#allocation5 + $0xa8] sm:$0xff]
    %v70 = vld [vmem:[#allocation5 + $0xb0] sm:$0xff]
    %v71 = vld [vmem:[#allocation5 + $0xb8] sm:$0xff]
    %v72 = vld [vmem:[#allocation5 + $0xc0] sm:$0xff]
    %v73 = vld [vmem:[#allocation5 + $0xc8] sm:$0xff]
    %v74 = vld [vmem:[#allocation5 + $0xd0] sm:$0xff]
    %v75 = vld [vmem:[#allocation5 + $0xd8] sm:$0xff]
    %v76 = vld [vmem:[#allocation5 + $0xe0] sm:$0xff]
    %v77 = vld [vmem:[#allocation5 + $0xe8] sm:$0xff]
    %v78 = vld [vmem:[#allocation5 + $0xf0] sm:$0xff]
    %v79 = vld [vmem:[#allocation5 + $0xf8] sm:$0xff]
    %80 = vmatprep.subr.mxu0 0.0
    %81 = vmatpush1.msra.mxu0 %v48
    %82 = vmatprep.subr.mxu0 0.0
    %83 = vmatpush1.msra.mxu0 %v49
    %84 = vmatprep.subr.mxu0 0.0
    %85 = vmatpush1.msra.mxu0 %v50
    %86 = vmatprep.subr.mxu0 0.0
    %87 = vmatpush1.msra.mxu0 %v51
    %88 = vmatprep.subr.mxu0 0.0
    %89 = vmatpush1.msra.mxu0 %v52
    %90 = vmatprep.subr.mxu0 0.0
    %91 = vmatpush1.msra.mxu0 %v53
    %92 = vmatprep.subr.mxu0 0.0
    %93 = vmatpush1.msra.mxu0 %v54
    %94 = vmatprep.subr.mxu0 0.0
    %95 = vmatpush1.msra.mxu0 %v55
    %96 = vmatprep.subr.mxu0 0.0
    %97 = vmatpush1.msra.mxu0 %v56
    %98 = vmatprep.subr.mxu0 0.0
    %99 = vmatpush1.msra.mxu0 %v57
    %100 = vmatprep.subr.mxu0 0.0
    %101 = vmatpush1.msra.mxu0 %v58
    %102 = vmatprep.subr.mxu0 0.0
    %103 = vmatpush1.msra.mxu0 %v59
    %104 = vmatprep.subr.mxu0 0.0
    %105 = vmatpush1.msra.mxu0 %v60
    %106 = vmatprep.subr.mxu0 0.0
    %107 = vmatpush1.msra.mxu0 %v61
    %108 = vmatprep.subr.mxu0 0.0
    %109 = vmatpush1.msra.mxu0 %v62
    %110 = vmatprep.subr.mxu0 0.0
    %111 = vmatpush1.msra.mxu0 %v63
    %112 = vmatprep.subr.mxu0 0.0
    %113 = vmatpush1.msra.mxu0 %v64
    %114 = vmatprep.subr.mxu0 0.0
    %115 = vmatpush1.msra.mxu0 %v65
    %116 = vmatprep.subr.mxu0 0.0
    %117 = vmatpush1.msra.mxu0 %v66
    %118 = vmatprep.subr.mxu0 0.0
    %119 = vmatpush1.msra.mxu0 %v67
    %120 = vmatprep.subr.mxu0 0.0
    %121 = vmatpush1.msra.mxu0 %v68
    %122 = vmatprep.subr.mxu0 0.0
    %123 = vmatpush1.msra.mxu0 %v69
    %124 = vmatprep.subr.mxu0 0.0
    %125 = vmatpush1.msra.mxu0 %v70
    %126 = vmatprep.subr.mxu0 0.0
    %127 = vmatpush1.msra.mxu0 %v71
    %128 = vmatprep.subr.mxu0 0.0
    %129 = vmatpush1.msra.mxu0 %v72
    %130 = vmatprep.subr.mxu0 0.0
    %131 = vmatpush1.msra.mxu0 %v73
    %132 = vmatprep.subr.mxu0 0.0
    %133 = vmatpush1.msra.mxu0 %v74
    %134 = vmatprep.subr.mxu0 0.0
    %135 = vmatpush1.msra.mxu0 %v75
    %136 = vmatprep.subr.mxu0 0.0
    %137 = vmatpush1.msra.mxu0 %v76
    %138 = vmatprep.subr.mxu0 0.0
    %139 = vmatpush1.msra.mxu0 %v77
    %140 = vmatprep.subr.mxu0 0.0
    %141 = vmatpush1.msra.mxu0 %v78
    %142 = vmatprep.subr.mxu0 0.0
    %143 = vmatpush1.msra.mxu0 %v79
    %144 = vmatprep.mubr.f32.mxu0 %v39
    %145 = vmatmul.mubr.f32.gmra.mrb[0].mxu0 %v38
    %v146 = vpop.f32.mrb[0].mxu0
    %v147 = vadd.f32 0.0, %v146
    %v148 = vpop.f32.mrb[0].mxu0
    %149 = vdwg.mxu0
    %v150 = vmul.f32 %v147, %v47
    %151 = vst [vmem:[#allocation7] sm:$0xff] %v150
    // Predicated region
    $region18: #{tpu_custom_call.1} parent=1 // pred_check
      _
    $region19: #{tpu_custom_call.1} parent=1 // pred_check_branch
      %153 = sbr.rel (0) target = $region21
    $region20: #{tpu_custom_call.1} parent=1 // pred_region
      %s155 = ssub.s32 128, 128
      %156 = vsyncadd [#allocation4], %s155
      %s158 = sshll.u32 [#allocation7], 4
      %s159 = int_to_ptr.vmem [resolvable:$true] %s158
      %161 = dma.vmem_to_hbm [thread:$0]  %s159, 128, %s2, [#allocation4]
    $region21: #{tpu_custom_call.1} parent=1 // pred_fallthru
      _
    // Predicated region
    $region22: #{tpu_custom_call.1} parent=1 // pred_check
      _
    $region23: #{tpu_custom_call.1} parent=1 // pred_check_branch
      %163 = sbr.rel (0) target = $region25
    $region24: #{tpu_custom_call.1} parent=1 // pred_region
      %164 = dma.done [#allocation4], 128
    $region25: #{tpu_custom_call.1} parent=1 // pred_fallthru
      _
    %165 = vsyncpa [#allocation3], 1
    %166 = vsyncpa [#allocation6], 1
    %167 = vsyncpa [#allocation4], 1

</llo_original>
